<compile_context>
chip_gen: v6e
topology: v6e:2x2x1
jax: 0.10.0
libtpu: 0.0.40
codegen_flags: <defaults>
</compile_context>

<pallas_src>
import jax
import jax.numpy as jnp
from jax.experimental import pallas as pl
from jax.experimental.pallas import tpu as pltpu


def _round_up(x, m):
    return ((x + m - 1) // m) * m


def _align_net_kernel(x_ref, w_ref, b_ref, o_ref):
    # x_ref: [B, D_pad] f32, w_ref: [D_pad, N/2] bf16, b_ref: [1, N/2] f32
    h = jnp.dot(
        x_ref[...],
        w_ref[...].astype(jnp.float32),     # up-cast bf16 weights; accumulate f32
        preferred_element_type=jnp.float32,
    )
    o_ref[...] = jnp.maximum(h + b_ref[...], 0.0)


def align_net_forward(comb_feat, params):
    """relu(comb_feat @ W + b) via one pallas_call (output split over 2 column tiles)."""
    B = comb_feat.shape[0]
    w = params["w"]                      # [D_pad, kdim] bf16 (rows zero-padded)
    b = params["b"]                      # [1, kdim] f32
    d_pad, kdim = w.shape
    half_n = kdim // 2                   # 256: one column tile per grid step / core

    # Zero-pad the 522 input features to the padded weight rows (exact).
    pad = d_pad - comb_feat.shape[1]
    if pad:
        comb_feat = jnp.pad(comb_feat, ((0, 0), (0, pad)))

    out = pl.pallas_call(
        _align_net_kernel,
        out_shape=jax.ShapeDtypeStruct((B, kdim), jnp.float32),
        grid=(2,),
        in_specs=[
            pl.BlockSpec((B, d_pad), lambda j: (0, 0)),      # x: full, reused
            pl.BlockSpec((d_pad, half_n), lambda j: (0, j)), # W column half
            pl.BlockSpec((1, half_n), lambda j: (0, j)),     # bias column half
        ],
        out_specs=pl.BlockSpec((B, half_n), lambda j: (0, j)),
        compiler_params=pltpu.CompilerParams(
            dimension_semantics=("parallel",),   # v7x: one head half per TensorCore
            vmem_limit_bytes=16 * 1024 * 1024,
        ),
    )(comb_feat, w, b)
    return out


def init_params(key, img_feat_dim=512, azi_feat_dim=10, kdim=512):
    """PyTorch-style Linear init; weight stored as [in, out], rows padded to 128 lanes, bf16."""
    d_in = img_feat_dim + azi_feat_dim
    d_pad = _round_up(d_in, 128)
    bound = 1.0 / (d_in ** 0.5)
    kw, kb = jax.random.split(key)
    w = jax.random.uniform(kw, (d_in, kdim), jnp.float32, -bound, bound)
    w = jnp.pad(w, ((0, d_pad - d_in), (0, 0)))              # zero rows for padded lanes
    b = jax.random.uniform(kb, (1, kdim), jnp.float32, -bound, bound)
    return {"w": w.astype(jnp.bfloat16), "b": b}


def _reference_forward(x, params):
    """Pure-JAX reference using the same (bf16-stored) weights."""
    d_pad = params["w"].shape[0]
    x_pad = jnp.pad(x, ((0, 0), (0, d_pad - x.shape[1])))
    w = params["w"].astype(jnp.float32)
    return jnp.maximum(x_pad @ w + params["b"], 0.0)


if __name__ == "__main__":
    key = jax.random.PRNGKey(0)
    k_x, k_p = jax.random.split(key)

    IMG_FEAT_DIM, AZI_FEAT_DIM, KDIM, BATCH = 512, 10, 512, 8
    comb_feat = jax.random.normal(
        k_x, (BATCH, IMG_FEAT_DIM + AZI_FEAT_DIM), jnp.float32
    )
    params = init_params(k_p, IMG_FEAT_DIM, AZI_FEAT_DIM, KDIM)

    out = jax.jit(align_net_forward)(comb_feat, params)
    jax.block_until_ready(out)

    ref = _reference_forward(comb_feat, params)
    assert out.shape == (BATCH, KDIM)
    assert jnp.allclose(out, ref, atol=2e-4, rtol=2e-4)

    print("KERNEL_OK")
</pallas_src>

<mosaic_0001>
module attributes {stable_mosaic.version = 11 : i64} {
  func.func @_align_net_kernel(%arg0: i32, %arg1: memref<8x640xf32, #tpu.memory_space<vmem>>, %arg2: memref<640x256xbf16, #tpu.memory_space<vmem>>, %arg3: memref<1x256xf32, #tpu.memory_space<vmem>>, %arg4: memref<8x256xf32, #tpu.memory_space<vmem>>) attributes {dimension_semantics = [#tpu.dimension_semantics<parallel>], iteration_bounds = array<i64: 2>, scalar_prefetch = 0 : i64, scratch_operands = 0 : i64, tpu.core_type = #tpu.core_type<tc>, window_params = [{pipeline_mode = #tpu.pipeline_mode<synchronous>, transform_indices = @transform_0, window_bounds = array<i64: 8, 640>}, {transform_indices = @transform_1, window_bounds = array<i64: 640, 256>}, {transform_indices = @transform_2, window_bounds = array<i64: 1, 256>}, {transform_indices = @transform_3, window_bounds = array<i64: 8, 256>}]} {
    %c0 = arith.constant 0 : index
    %c0_0 = arith.constant 0 : index
    %0 = vector.load %arg1[%c0, %c0_0] : memref<8x640xf32, #tpu.memory_space<vmem>>, vector<8x640xf32>
    %c0_1 = arith.constant 0 : index
    %c0_2 = arith.constant 0 : index
    %1 = vector.load %arg2[%c0_1, %c0_2] : memref<640x256xbf16, #tpu.memory_space<vmem>>, vector<640x256xbf16>
    %2 = arith.extf %1 : vector<640x256xbf16> to vector<640x256xf32>
    %cst = arith.constant dense<0.000000e+00> : vector<8x256xf32>
    %3 = tpu.matmul %0, %2, %cst {dimension_numbers = #tpu.dot_dimension_numbers<[1], [0], [0], [1], [0, 0, 1, 1], [], []>} : vector<8x640xf32>, vector<640x256xf32>, vector<8x256xf32> -> vector<8x256xf32>
    %c0_3 = arith.constant 0 : index
    %c0_4 = arith.constant 0 : index
    %4 = vector.load %arg3[%c0_3, %c0_4] : memref<1x256xf32, #tpu.memory_space<vmem>>, vector<1x256xf32>
    %5 = vector.broadcast %4 : vector<1x256xf32> to vector<8x256xf32>
    %6 = arith.addf %3, %5 : vector<8x256xf32>
    %cst_5 = arith.constant 0.000000e+00 : f32
    %7 = vector.broadcast %cst_5 : f32 to vector<8x256xf32>
    %8 = arith.maximumf %6, %7 : vector<8x256xf32>
    %c0_6 = arith.constant 0 : index
    %c0_7 = arith.constant 0 : index
    %9 = vector.load %arg4[%c0_6, %c0_7] : memref<8x256xf32, #tpu.memory_space<vmem>>, vector<8x256xf32>
    tpu.vector_store %arg4[%c0_6, %c0_7], %8 {strides = array<i32>} : memref<8x256xf32, #tpu.memory_space<vmem>>, vector<8x256xf32>,
    return
  }
  func.func @transform_0(%arg0: i32) -> (i32, i32) {
    %c0_i32 = arith.constant 0 : i32
    %c0_i32_0 = arith.constant 0 : i32
    %c0_i32_1 = arith.constant 0 : i32
    return %c0_i32, %c0_i32_0 : i32, i32
  }
  func.func @transform_1(%arg0: i32) -> (i32, i32) {
    %c0_i32 = arith.constant 0 : i32
    %c0_i32_0 = arith.constant 0 : i32
    return %c0_i32, %arg0 : i32, i32
  }
  func.func @transform_2(%arg0: i32) -> (i32, i32) {
    %c0_i32 = arith.constant 0 : i32
    %c0_i32_0 = arith.constant 0 : i32
    return %c0_i32, %arg0 : i32, i32
  }
  func.func @transform_3(%arg0: i32) -> (i32, i32) {
    %c0_i32 = arith.constant 0 : i32
    %c0_i32_0 = arith.constant 0 : i32
    return %c0_i32, %arg0 : i32, i32
  }
}

</mosaic_0001>

<llo_original>
// kernel: align_net_forward.1
$region0: #{align_net_forward.1}
  #allocation0 [shape = 'u32[]', space=smem, size = 0x4, offset = 0x4, fixed_abs, tag = 'smem constant byte address 0x4 - core index']
  #allocation1 [shape = 'u32[144,128]{1,0:T(1,128)}', space=vmem, size = 0x12000, scoped, tag = 'internal scratch']
  %s0 = inlined_call_operand.vmem [shape: f32[8,640], index: 0, kind: input, shape index: {}]
  %s1 = inlined_call_operand.hbm [shape: bf16[640,512], index: 1, kind: input, shape index: {}]
  %s2 = inlined_call_operand.vmem [shape: f32[1,512], index: 2, kind: input, shape index: {}]
  %s3 = inlined_call_operand.hbm [shape: f32[8,512], index: 3, kind: output, shape index: {}]
  %s4 = sld [smem:[#allocation0]]
  $region49: #{align_net_forward.1} parent=0
    _
  %s6 = ssub.s32 1, %s4
  %s7 = scalar_select 0, %s6, %s4
  $region1: #{align_net_forward.1} parent=0
    #allocation2 [shape = 'u8[655360]{0}', space=vmem, size = 0xa0000, scoped, tag = 'input window, operand 1']
    #allocation3 [shape = 's32[2]{0}', space=sflag, size = 0x8, scoped, tag = 'scoped memory for align_net_forward.1']
    #allocation4 [shape = 's32[2]{0}', space=sflag, size = 0x8, scoped, tag = 'scoped memory for align_net_forward.1']
    #allocation5 [shape = 'u8[16384]{0}', space=vmem, size = 0x4000, scoped, tag = 'output window, operand 0']
    %8 = vsyncpa [#allocation3], 0
    %s9 = scalar_lea.sflag [#allocation3], 1
    %10 = vsyncpa %s9, 0
    %11 = vsyncpa [#allocation4], 0
    %s12 = scalar_lea.sflag [#allocation4], 1
    %13 = vsyncpa %s12, 0
    loop: start=0, step=1, limit=4
    $region2: #{align_net_forward.1} parent=1 // loop_pre_header
      _
    $region3: #{align_net_forward.1} parent=1 // loop_header
      %s15 = sphi 0, %s19
      %p16 = scmp.ge.s32.totalorder %s15, 4
      %s23 = sphi 0, %s23
      %s25 = sphi 0, %s23
      %s26 = sphi 0, %s25
      %s40 = sphi 0, %s26
      %s46 = sphi 0, %s48
      %s49 = sphi 0, %s46
      %s50 = sphi 0, %s49
      %s66 = sphi 0, %s50
      %s72 = sphi 0, %s74
      %s75 = sphi 0, %s72
      %s76 = sphi 0, %s75
      %s92 = sphi 0, %s76
      %s98 = sphi 0, %s100
      %s101 = sphi 0, %s98
      %s102 = sphi 0, %s101
      %s118 = sphi 0, %s102
    $region4: #{align_net_forward.1} parent=1 // loop_header_branch
      %18 = sbr.rel (%p16) target = $region8
    $region5: #{align_net_forward.1} parent=1 // loop_body
      %s20 = ssub.s32 %s15, 1
      %s21 = ssub.s32 %s15, 2
      %s22 = sadd.s32 %s15, 1
      %s24 = sadd.s32 %s23, 1
      %p27 = scmp.eq.s32.totalorder %s15, 1
      %p28 = scmp.ne.s32.totalorder %s23, %s25
      %p29 = scmp.eq.s32.totalorder %s15, 0
      %p30 = por %p28, %p29
      %p31 = scmp.ne.s32.totalorder %s23, %s25
      %p32 = scmp.eq.s32.totalorder %s20, 1
      %p33 = por %p31, %p32
      %p34 = scmp.ne.s32.totalorder %s25, %s26
      %p35 = scmp.eq.s32.totalorder %s20, 0
      %p36 = por %p34, %p35
      %p37 = scmp.ne.s32.totalorder %s25, %s26
      %p38 = scmp.eq.s32.totalorder %s21, 1
      %p39 = por %p37, %p38
      %p41 = scmp.ne.s32.totalorder %s26, %s40
      %p42 = scmp.eq.s32.totalorder %s21, 0
      %p43 = por %p41, %p42
      %s44 = ssub.s32 %s15, %s22
      %p45 = scmp.eq.s32.totalorder %s44, 0
      %s47 = sadd.s32 %s46, 1
      %s48 = scalar_select %p45, %s46, %s47
      %p51 = pneg %p45
      %p52 = scmp.eq.s32.totalorder %s15, 1
      %p53 = por %p51, %p52
      %p54 = scmp.ne.s32.totalorder %s46, %s49
      %p55 = scmp.eq.s32.totalorder %s15, 0
      %p56 = por %p54, %p55
      %p57 = scmp.ne.s32.totalorder %s46, %s49
      %p58 = scmp.eq.s32.totalorder %s20, 1
      %p59 = por %p57, %p58
      %p60 = scmp.ne.s32.totalorder %s49, %s50
      %p61 = scmp.eq.s32.totalorder %s20, 0
      %p62 = por %p60, %p61
      %p63 = scmp.ne.s32.totalorder %s49, %s50
      %p64 = scmp.eq.s32.totalorder %s21, 1
      %p65 = por %p63, %p64
      %p67 = scmp.ne.s32.totalorder %s50, %s66
      %p68 = scmp.eq.s32.totalorder %s21, 0
      %p69 = por %p67, %p68
      %s70 = ssub.s32 %s15, %s22
      %p71 = scmp.eq.s32.totalorder %s70, 0
      %s73 = sadd.s32 %s72, 1
      %s74 = scalar_select %p71, %s72, %s73
      %p77 = pneg %p71
      %p78 = scmp.eq.s32.totalorder %s15, 1
      %p79 = por %p77, %p78
      %p80 = scmp.ne.s32.totalorder %s72, %s75
      %p81 = scmp.eq.s32.totalorder %s15, 0
      %p82 = por %p80, %p81
      %p83 = scmp.ne.s32.totalorder %s72, %s75
      %p84 = scmp.eq.s32.totalorder %s20, 1
      %p85 = por %p83, %p84
      %p86 = scmp.ne.s32.totalorder %s75, %s76
      %p87 = scmp.eq.s32.totalorder %s20, 0
      %p88 = por %p86, %p87
      %p89 = scmp.ne.s32.totalorder %s75, %s76
      %p90 = scmp.eq.s32.totalorder %s21, 1
      %p91 = por %p89, %p90
      %p93 = scmp.ne.s32.totalorder %s76, %s92
      %p94 = scmp.eq.s32.totalorder %s21, 0
      %p95 = por %p93, %p94
      %s96 = ssub.s32 %s15, %s22
      %p97 = scmp.eq.s32.totalorder %s96, 0
      %s99 = sadd.s32 %s98, 1
      %s100 = scalar_select %p97, %s98, %s99
      %p103 = pneg %p97
      %p104 = scmp.eq.s32.totalorder %s15, 1
      %p105 = por %p103, %p104
      %p106 = scmp.ne.s32.totalorder %s98, %s101
      %p107 = scmp.eq.s32.totalorder %s15, 0
      %p108 = por %p106, %p107
      %p109 = scmp.ne.s32.totalorder %s98, %s101
      %p110 = scmp.eq.s32.totalorder %s20, 1
      %p111 = por %p109, %p110
      %p112 = scmp.ne.s32.totalorder %s101, %s102
      %p113 = scmp.eq.s32.totalorder %s20, 0
      %p114 = por %p112, %p113
      %p115 = scmp.ne.s32.totalorder %s101, %s102
      %p116 = scmp.eq.s32.totalorder %s21, 1
      %p117 = por %p115, %p116
      %p119 = scmp.ne.s32.totalorder %s102, %s118
      %p120 = scmp.eq.s32.totalorder %s21, 0
      %p121 = por %p119, %p120
      %p122 = scmp.le.s32.totalorder 1, %s15
      %p123 = scmp.lt.s32.totalorder %s15, 3
      %p124 = pnand %p122, %p123
      %p125 = pneg %p124
      // Predicated region
      $region9: #{align_net_forward.1} parent=5 // pred_check
        _
      $region10: #{align_net_forward.1} parent=5 // pred_check_branch
        %127 = sbr.rel (%p124) target = $region12
      $region11: #{align_net_forward.1} parent=5 // pred_region
        %s128 = ssub.s32 %s15, 1
        // Predicated region
        $region13: #{align_net_forward.1} parent=11 // pred_check
          %p129 = pneg %p36
        $region14: #{align_net_forward.1} parent=11 // pred_check_branch
          %131 = sbr.rel (%p129) target = $region16
        $region15: #{align_net_forward.1} parent=11 // pred_region
          _
        $region16: #{align_net_forward.1} parent=11 // pred_fallthru
          _
      $region12: #{align_net_forward.1} parent=5 // pred_fallthru
        _
      %p132 = scmp.lt.s32.totalorder %s15, 2
      // Predicated region
      $region17: #{align_net_forward.1} parent=5 // pred_check
        %p133 = pneg %p132
      $region18: #{align_net_forward.1} parent=5 // pred_check_branch
        %135 = sbr.rel (%p133) target = $region20
      $region19: #{align_net_forward.1} parent=5 // pred_region
        // Predicated region
        $region21: #{align_net_forward.1} parent=19 // pred_check
          %p136 = pneg %p56
        $region22: #{align_net_forward.1} parent=19 // pred_check_branch
          %138 = sbr.rel (%p136) target = $region24
        $region23: #{align_net_forward.1} parent=19 // pred_region
          %s139 = sand.u32 %s46, 1
          %s140 = scalar_lea.sflag [#allocation3], %s139
          %s141 = sand.u32 %s46, 1
          %s142 = smul.addr %s141, 640
          %s143 = scalar_lea.vmem [#allocation2], %s142
          %s144 = smul.u32 2, %s15
          %s146 = ssub.s32 10240, 10240
          %147 = vsyncadd %s140, %s146
          %s148 = smul.addr %s144, 64
          %s149 = scalar_lea.hbm %s1, %s148
          %s150 = sshll.u32 %s143, 4
          %s151 = int_to_ptr.vmem [resolvable:$true] %s150
          %156 = dma.hbm_to_vmem [thread:$0]  %s149, 10240, %s151, %s140, 256, 128, 8
        $region24: #{align_net_forward.1} parent=19 // pred_fallthru
          _
        // Predicated region
        $region25: #{align_net_forward.1} parent=19 // pred_check
          %p157 = pneg %p82
        $region26: #{align_net_forward.1} parent=19 // pred_check_branch
          %159 = sbr.rel (%p157) target = $region28
        $region27: #{align_net_forward.1} parent=19 // pred_region
          %s160 = smul.u32 2, %s15
          %p161 = scmp.lt.s32.totalorder %s160, 3
          %s162 = scalar_select %p161, %s160, 3
          %s163 = scalar_lea.vmem %s2, %s162
          %s164 = smul.u32 2, %s15
        $region28: #{align_net_forward.1} parent=19 // pred_fallthru
          _
      $region20: #{align_net_forward.1} parent=5 // pred_fallthru
        _
      %p165 = scmp.le.s32.totalorder 1, %s15
      %p166 = scmp.lt.s32.totalorder %s15, 3
      %p167 = pnand %p165, %p166
      %p168 = pneg %p167
      // Predicated region
      $region29: #{align_net_forward.1} parent=5 // pred_check
        _
      $region30: #{align_net_forward.1} parent=5 // pred_check_branch
        %170 = sbr.rel (%p167) target = $region32
      $region31: #{align_net_forward.1} parent=5 // pred_region
        %s171 = ssub.s32 %s15, 1
        %s172 = sand.u32 %s49, 1
        %s173 = scalar_lea.sflag [#allocation3], %s172
        %s174 = sand.u32 %s49, 1
        %s175 = smul.addr %s174, 640
        %s176 = scalar_lea.vmem [#allocation2], %s175
        // Predicated region
        $region33: #{align_net_forward.1} parent=31 // pred_check
          %p177 = pneg %p62
        $region34: #{align_net_forward.1} parent=31 // pred_check_branch
          %179 = sbr.rel (%p177) target = $region36
        $region35: #{align_net_forward.1} parent=31 // pred_region
          %180 = dma.done %s173, 10240
        $region36: #{align_net_forward.1} parent=31 // pred_fallthru
          _
        %p181 = pneg %p36
        %p182 = pneg %p33
        %s183 = sand.u32 %s49, 1
        %s184 = scalar_lea.sflag [#allocation3], %s183
        %s185 = sand.u32 %s49, 1
        %s186 = smul.addr %s185, 640
        %s187 = scalar_lea.vmem [#allocation2], %s186
        %p188 = pneg %p62
        %p189 = pneg %p59
        %s190 = smul.u32 2, %s20
        %p191 = scmp.lt.s32.totalorder %s190, 3
        %s192 = scalar_select %p191, %s190, 3
        %s193 = scalar_lea.vmem %s2, %s192
        %p194 = pneg %p88
        %p195 = pneg %p85
        %p196 = pneg %p114
        %p197 = pneg %p111
        %s198 = sand.u32 %s101, 1
        %s199 = scalar_lea.sflag [#allocation4], %s198
        %s200 = sand.u32 %s101, 1
        %s201 = smul.addr %s200, 16
        %s202 = scalar_lea.vmem [#allocation5], %s201
        %s203 = smul.u32 2, %s20
        %s204 = smul.u32 2, %s20
        %p205 = scmp.lt.s32.totalorder %s204, 3
        %s206 = scalar_select %p205, %s204, 3
        %s207 = scalar_lea.vmem %s2, %s206
        %s208 = smul.u32 2, %s20
        %s209 = smul.u32 2, %s20
        %v210 = vld [vmem:[%s0] sm:$0xff]
        %v211 = vld [vmem:[%s0 + $0x8] sm:$0xff]
        %v212 = vld [vmem:[%s0 + $0x10] sm:$0xff]
        %v213 = vld [vmem:[%s0 + $0x18] sm:$0xff]
        %v214 = vld [vmem:[%s0 + $0x20] sm:$0xff]
        %v215 = vld [vmem:[%s176] sm:$0xff]
        %v216 = vld [vmem:[%s176 + $0x8] sm:$0xff]
        %v217 = vld [vmem:[%s176 + $0x10] sm:$0xff]
        %v218 = vld [vmem:[%s176 + $0x18] sm:$0xff]
        %v219 = vld [vmem:[%s176 + $0x20] sm:$0xff]
        %v220 = vld [vmem:[%s176 + $0x28] sm:$0xff]
        %v221 = vld [vmem:[%s176 + $0x30] sm:$0xff]
        %v222 = vld [vmem:[%s176 + $0x38] sm:$0xff]
        %v223 = vld [vmem:[%s176 + $0x40] sm:$0xff]
        %v224 = vld [vmem:[%s176 + $0x48] sm:$0xff]
        %v225 = vld [vmem:[%s176 + $0x50] sm:$0xff]
        %v226 = vld [vmem:[%s176 + $0x58] sm:$0xff]
        %v227 = vld [vmem:[%s176 + $0x60] sm:$0xff]
        %v228 = vld [vmem:[%s176 + $0x68] sm:$0xff]
        %v229 = vld [vmem:[%s176 + $0x70] sm:$0xff]
        %v230 = vld [vmem:[%s176 + $0x78] sm:$0xff]
        %v231 = vld [vmem:[%s176 + $0x80] sm:$0xff]
        %v232 = vld [vmem:[%s176 + $0x88] sm:$0xff]
        %v233 = vld [vmem:[%s176 + $0x90] sm:$0xff]
        %v234 = vld [vmem:[%s176 + $0x98] sm:$0xff]
        %v235 = vld [vmem:[%s176 + $0xa0] sm:$0xff]
        %v236 = vld [vmem:[%s176 + $0xa8] sm:$0xff]
        %v237 = vld [vmem:[%s176 + $0xb0] sm:$0xff]
        %v238 = vld [vmem:[%s176 + $0xb8] sm:$0xff]
        %v239 = vld [vmem:[%s176 + $0xc0] sm:$0xff]
        %v240 = vld [vmem:[%s176 + $0xc8] sm:$0xff]
        %v241 = vld [vmem:[%s176 + $0xd0] sm:$0xff]
        %v242 = vld [vmem:[%s176 + $0xd8] sm:$0xff]
        %v243 = vld [vmem:[%s176 + $0xe0] sm:$0xff]
        %v244 = vld [vmem:[%s176 + $0xe8] sm:$0xff]
        %v245 = vld [vmem:[%s176 + $0xf0] sm:$0xff]
        %v246 = vld [vmem:[%s176 + $0xf8] sm:$0xff]
        %v247 = vld [vmem:[%s176 + $0x100] sm:$0xff]
        %v248 = vld [vmem:[%s176 + $0x108] sm:$0xff]
        %v249 = vld [vmem:[%s176 + $0x110] sm:$0xff]
        %v250 = vld [vmem:[%s176 + $0x118] sm:$0xff]
        %v251 = vld [vmem:[%s176 + $0x120] sm:$0xff]
        %v252 = vld [vmem:[%s176 + $0x128] sm:$0xff]
        %v253 = vld [vmem:[%s176 + $0x130] sm:$0xff]
        %v254 = vld [vmem:[%s176 + $0x138] sm:$0xff]
        %v255 = vld [vmem:[%s176 + $0x140] sm:$0xff]
        %v256 = vld [vmem:[%s176 + $0x148] sm:$0xff]
        %v257 = vld [vmem:[%s176 + $0x150] sm:$0xff]
        %v258 = vld [vmem:[%s176 + $0x158] sm:$0xff]
        %v259 = vld [vmem:[%s176 + $0x160] sm:$0xff]
        %v260 = vld [vmem:[%s176 + $0x168] sm:$0xff]
        %v261 = vld [vmem:[%s176 + $0x170] sm:$0xff]
        %v262 = vld [vmem:[%s176 + $0x178] sm:$0xff]
        %v263 = vld [vmem:[%s176 + $0x180] sm:$0xff]
        %v264 = vld [vmem:[%s176 + $0x188] sm:$0xff]
        %v265 = vld [vmem:[%s176 + $0x190] sm:$0xff]
        %v266 = vld [vmem:[%s176 + $0x198] sm:$0xff]
        %v267 = vld [vmem:[%s176 + $0x1a0] sm:$0xff]
        %v268 = vld [vmem:[%s176 + $0x1a8] sm:$0xff]
        %v269 = vld [vmem:[%s176 + $0x1b0] sm:$0xff]
        %v270 = vld [vmem:[%s176 + $0x1b8] sm:$0xff]
        %v271 = vld [vmem:[%s176 + $0x1c0] sm:$0xff]
        %v272 = vld [vmem:[%s176 + $0x1c8] sm:$0xff]
        %v273 = vld [vmem:[%s176 + $0x1d0] sm:$0xff]
        %v274 = vld [vmem:[%s176 + $0x1d8] sm:$0xff]
        %v275 = vld [vmem:[%s176 + $0x1e0] sm:$0xff]
        %v276 = vld [vmem:[%s176 + $0x1e8] sm:$0xff]
        %v277 = vld [vmem:[%s176 + $0x1f0] sm:$0xff]
        %v278 = vld [vmem:[%s176 + $0x1f8] sm:$0xff]
        %v279 = vld [vmem:[%s176 + $0x200] sm:$0xff]
        %v280 = vld [vmem:[%s176 + $0x208] sm:$0xff]
        %v281 = vld [vmem:[%s176 + $0x210] sm:$0xff]
        %v282 = vld [vmem:[%s176 + $0x218] sm:$0xff]
        %v283 = vld [vmem:[%s176 + $0x220] sm:$0xff]
        %v284 = vld [vmem:[%s176 + $0x228] sm:$0xff]
        %v285 = vld [vmem:[%s176 + $0x230] sm:$0xff]
        %v286 = vld [vmem:[%s176 + $0x238] sm:$0xff]
        %v287 = vld [vmem:[%s176 + $0x240] sm:$0xff]
        %v288 = vld [vmem:[%s176 + $0x248] sm:$0xff]
        %v289 = vld [vmem:[%s176 + $0x250] sm:$0xff]
        %v290 = vld [vmem:[%s176 + $0x258] sm:$0xff]
        %v291 = vld [vmem:[%s176 + $0x260] sm:$0xff]
        %v292 = vld [vmem:[%s176 + $0x268] sm:$0xff]
        %v293 = vld [vmem:[%s176 + $0x270] sm:$0xff]
        %v294 = vld [vmem:[%s176 + $0x278] sm:$0xff]
        %v295 = vunpack.c.l.bf16 %v215
        %v296 = vunpack.c.h.bf16 %v215
        %v297 = vunpack.c.l.bf16 %v216
        %v298 = vunpack.c.h.bf16 %v216
        %v299 = vunpack.c.l.bf16 %v217
        %v300 = vunpack.c.h.bf16 %v217
        %v301 = vunpack.c.l.bf16 %v218
        %v302 = vunpack.c.h.bf16 %v218
        %v303 = vunpack.c.l.bf16 %v219
        %v304 = vunpack.c.h.bf16 %v219
        %v305 = vunpack.c.l.bf16 %v220
        %v306 = vunpack.c.h.bf16 %v220
        %v307 = vunpack.c.l.bf16 %v221
        %v308 = vunpack.c.h.bf16 %v221
        %v309 = vunpack.c.l.bf16 %v222
        %v310 = vunpack.c.h.bf16 %v222
        %v311 = vunpack.c.l.bf16 %v223
        %v312 = vunpack.c.h.bf16 %v223
        %v313 = vunpack.c.l.bf16 %v224
        %v314 = vunpack.c.h.bf16 %v224
        %v315 = vunpack.c.l.bf16 %v225
        %v316 = vunpack.c.h.bf16 %v225
        %v317 = vunpack.c.l.bf16 %v226
        %v318 = vunpack.c.h.bf16 %v226
        %v319 = vunpack.c.l.bf16 %v227
        %v320 = vunpack.c.h.bf16 %v227
        %v321 = vunpack.c.l.bf16 %v228
        %v322 = vunpack.c.h.bf16 %v228
        %v323 = vunpack.c.l.bf16 %v229
        %v324 = vunpack.c.h.bf16 %v229
        %v325 = vunpack.c.l.bf16 %v230
        %v326 = vunpack.c.h.bf16 %v230
        %v327 = vunpack.c.l.bf16 %v231
        %v328 = vunpack.c.h.bf16 %v231
        %v329 = vunpack.c.l.bf16 %v232
        %v330 = vunpack.c.h.bf16 %v232
        %v331 = vunpack.c.l.bf16 %v233
        %v332 = vunpack.c.h.bf16 %v233
        %v333 = vunpack.c.l.bf16 %v234
        %v334 = vunpack.c.h.bf16 %v234
        %v335 = vunpack.c.l.bf16 %v235
        %v336 = vunpack.c.h.bf16 %v235
        %v337 = vunpack.c.l.bf16 %v236
        %v338 = vunpack.c.h.bf16 %v236
        %v339 = vunpack.c.l.bf16 %v237
        %v340 = vunpack.c.h.bf16 %v237
        %v341 = vunpack.c.l.bf16 %v238
        %v342 = vunpack.c.h.bf16 %v238
        %v343 = vunpack.c.l.bf16 %v239
        %v344 = vunpack.c.h.bf16 %v239
        %v345 = vunpack.c.l.bf16 %v240
        %v346 = vunpack.c.h.bf16 %v240
        %v347 = vunpack.c.l.bf16 %v241
        %v348 = vunpack.c.h.bf16 %v241
        %v349 = vunpack.c.l.bf16 %v242
        %v350 = vunpack.c.h.bf16 %v242
        %v351 = vunpack.c.l.bf16 %v243
        %v352 = vunpack.c.h.bf16 %v243
        %v353 = vunpack.c.l.bf16 %v244
        %v354 = vunpack.c.h.bf16 %v244
        %v355 = vunpack.c.l.bf16 %v245
        %v356 = vunpack.c.h.bf16 %v245
        %v357 = vunpack.c.l.bf16 %v246
        %v358 = vunpack.c.h.bf16 %v246
        %v359 = vunpack.c.l.bf16 %v247
        %v360 = vunpack.c.h.bf16 %v247
        %v361 = vunpack.c.l.bf16 %v248
        %v362 = vunpack.c.h.bf16 %v248
        %v363 = vunpack.c.l.bf16 %v249
        %v364 = vunpack.c.h.bf16 %v249
        %v365 = vunpack.c.l.bf16 %v250
        %v366 = vunpack.c.h.bf16 %v250
        %v367 = vunpack.c.l.bf16 %v251
        %v368 = vunpack.c.h.bf16 %v251
        %v369 = vunpack.c.l.bf16 %v252
        %v370 = vunpack.c.h.bf16 %v252
        %v371 = vunpack.c.l.bf16 %v253
        %v372 = vunpack.c.h.bf16 %v253
        %v373 = vunpack.c.l.bf16 %v254
        %v374 = vunpack.c.h.bf16 %v254
        %v375 = vunpack.c.l.bf16 %v255
        %v376 = vunpack.c.h.bf16 %v255
        %v377 = vunpack.c.l.bf16 %v256
        %v378 = vunpack.c.h.bf16 %v256
        %v379 = vunpack.c.l.bf16 %v257
        %v380 = vunpack.c.h.bf16 %v257
        %v381 = vunpack.c.l.bf16 %v258
        %v382 = vunpack.c.h.bf16 %v258
        %v383 = vunpack.c.l.bf16 %v259
        %v384 = vunpack.c.h.bf16 %v259
        %v385 = vunpack.c.l.bf16 %v260
        %v386 = vunpack.c.h.bf16 %v260
        %v387 = vunpack.c.l.bf16 %v261
        %v388 = vunpack.c.h.bf16 %v261
        %v389 = vunpack.c.l.bf16 %v262
        %v390 = vunpack.c.h.bf16 %v262
        %v391 = vunpack.c.l.bf16 %v263
        %v392 = vunpack.c.h.bf16 %v263
        %v393 = vunpack.c.l.bf16 %v264
        %v394 = vunpack.c.h.bf16 %v264
        %v395 = vunpack.c.l.bf16 %v265
        %v396 = vunpack.c.h.bf16 %v265
        %v397 = vunpack.c.l.bf16 %v266
        %v398 = vunpack.c.h.bf16 %v266
        %v399 = vunpack.c.l.bf16 %v267
        %v400 = vunpack.c.h.bf16 %v267
        %v401 = vunpack.c.l.bf16 %v268
        %v402 = vunpack.c.h.bf16 %v268
        %v403 = vunpack.c.l.bf16 %v269
        %v404 = vunpack.c.h.bf16 %v269
        %v405 = vunpack.c.l.bf16 %v270
        %v406 = vunpack.c.h.bf16 %v270
        %v407 = vunpack.c.l.bf16 %v271
        %v408 = vunpack.c.h.bf16 %v271
        %v409 = vunpack.c.l.bf16 %v272
        %v410 = vunpack.c.h.bf16 %v272
        %v411 = vunpack.c.l.bf16 %v273
        %v412 = vunpack.c.h.bf16 %v273
        %v413 = vunpack.c.l.bf16 %v274
        %v414 = vunpack.c.h.bf16 %v274
        %v415 = vunpack.c.l.bf16 %v275
        %v416 = vunpack.c.h.bf16 %v275
        %v417 = vunpack.c.l.bf16 %v276
        %v418 = vunpack.c.h.bf16 %v276
        %v419 = vunpack.c.l.bf16 %v277
        %v420 = vunpack.c.h.bf16 %v277
        %v421 = vunpack.c.l.bf16 %v278
        %v422 = vunpack.c.h.bf16 %v278
        %v423 = vunpack.c.l.bf16 %v279
        %v424 = vunpack.c.h.bf16 %v279
        %v425 = vunpack.c.l.bf16 %v280
        %v426 = vunpack.c.h.bf16 %v280
        %v427 = vunpack.c.l.bf16 %v281
        %v428 = vunpack.c.h.bf16 %v281
        %v429 = vunpack.c.l.bf16 %v282
        %v430 = vunpack.c.h.bf16 %v282
        %v431 = vunpack.c.l.bf16 %v283
        %v432 = vunpack.c.h.bf16 %v283
        %v433 = vunpack.c.l.bf16 %v284
        %v434 = vunpack.c.h.bf16 %v284
        %v435 = vunpack.c.l.bf16 %v285
        %v436 = vunpack.c.h.bf16 %v285
        %v437 = vunpack.c.l.bf16 %v286
        %v438 = vunpack.c.h.bf16 %v286
        %v439 = vunpack.c.l.bf16 %v287
        %v440 = vunpack.c.h.bf16 %v287
        %v441 = vunpack.c.l.bf16 %v288
        %v442 = vunpack.c.h.bf16 %v288
        %v443 = vunpack.c.l.bf16 %v289
        %v444 = vunpack.c.h.bf16 %v289
        %v445 = vunpack.c.l.bf16 %v290
        %v446 = vunpack.c.h.bf16 %v290
        %v447 = vunpack.c.l.bf16 %v291
        %v448 = vunpack.c.h.bf16 %v291
        %v449 = vunpack.c.l.bf16 %v292
        %v450 = vunpack.c.h.bf16 %v292
        %v451 = vunpack.c.l.bf16 %v293
        %v452 = vunpack.c.h.bf16 %v293
        %v453 = vunpack.c.l.bf16 %v294
        %v454 = vunpack.c.h.bf16 %v294
        %v455 = vld [vmem:[%s207] sm:$0x3]
        %v457 = vlaneseq
        %v458 = vshrl.u32 %v457, 7
        %v459 = vsub.s32 0, %v458
        %v460 = vrot.slane %v455, %v459
        %v461 = vlaneseq
        %v462 = vshrl.u32 %v461, 7
        %v463 = vsub.s32 1, %v462
        %v464 = vrot.slane %v455, %v463
        %467 = vmatprep.subr.mxu0 %v326
        %468 = vmatpush1.msra.mxu0 %v325
        %469 = vmatprep.subr.mxu0 %v324
        %470 = vmatpush1.msra.mxu0 %v323
        %471 = vmatprep.subr.mxu0 %v322
        %472 = vmatpush1.msra.mxu0 %v321
        %473 = vmatprep.subr.mxu0 %v320
        %474 = vmatpush1.msra.mxu0 %v319
        %475 = vmatprep.subr.mxu0 %v318
        %476 = vmatpush1.msra.mxu0 %v317
        %477 = vmatprep.subr.mxu0 %v316
        %478 = vmatpush1.msra.mxu0 %v315
        %479 = vmatprep.subr.mxu0 %v314
        %480 = vmatpush1.msra.mxu0 %v313
        %481 = vmatprep.subr.mxu0 %v312
        %482 = vmatpush1.msra.mxu0 %v311
        %483 = vmatprep.subr.mxu0 %v310
        %484 = vmatpush1.msra.mxu0 %v309
        %485 = vmatprep.subr.mxu0 %v308
        %486 = vmatpush1.msra.mxu0 %v307
        %487 = vmatprep.subr.mxu0 %v306
        %488 = vmatpush1.msra.mxu0 %v305
        %489 = vmatprep.subr.mxu0 %v304
        %490 = vmatpush1.msra.mxu0 %v303
        %491 = vmatprep.subr.mxu0 %v302
        %492 = vmatpush1.msra.mxu0 %v301
        %493 = vmatprep.subr.mxu0 %v300
        %494 = vmatpush1.msra.mxu0 %v299
        %495 = vmatprep.subr.mxu0 %v298
        %496 = vmatpush1.msra.mxu0 %v297
        %497 = vmatprep.subr.mxu0 %v296
        %498 = vmatpush1.msra.mxu0 %v295
        %499 = vmatprep.subr.mxu0 %v358
        %500 = vmatpush2.msra.mxu0 %v357
        %501 = vmatprep.subr.mxu0 %v356
        %502 = vmatpush2.msra.mxu0 %v355
        %503 = vmatprep.subr.mxu0 %v354
        %504 = vmatpush2.msra.mxu0 %v353
        %505 = vmatprep.subr.mxu0 %v352
        %506 = vmatpush2.msra.mxu0 %v351
        %507 = vmatprep.subr.mxu0 %v350
        %508 = vmatpush2.msra.mxu0 %v349
        %509 = vmatprep.subr.mxu0 %v348
        %510 = vmatpush2.msra.mxu0 %v347
        %511 = vmatprep.subr.mxu0 %v346
        %512 = vmatpush2.msra.mxu0 %v345
        %513 = vmatprep.subr.mxu0 %v344
        %514 = vmatpush2.msra.mxu0 %v343
        %515 = vmatprep.subr.mxu0 %v342
        %516 = vmatpush2.msra.mxu0 %v341
        %517 = vmatprep.subr.mxu0 %v340
        %518 = vmatpush2.msra.mxu0 %v339
        %519 = vmatprep.subr.mxu0 %v338
        %520 = vmatpush2.msra.mxu0 %v337
        %521 = vmatprep.subr.mxu0 %v336
        %522 = vmatpush2.msra.mxu0 %v335
        %523 = vmatprep.subr.mxu0 %v334
        %524 = vmatpush2.msra.mxu0 %v333
        %525 = vmatprep.subr.mxu0 %v332
        %526 = vmatpush2.msra.mxu0 %v331
        %527 = vmatprep.subr.mxu0 %v330
        %528 = vmatpush2.msra.mxu0 %v329
        %529 = vmatprep.subr.mxu0 %v328
        %530 = vmatpush2.msra.mxu0 %v327
        %531 = vmatprep.mubr.f32.mxu0 %v211
        %532 = vmatmul.mubr.f32.gmra.mxu0 %v210
        %v533 = vpop.f32.mrf.mxu0
        %v534 = vadd.f32 %v460, %v533
        %v535 = vpop.f32.mrf.mxu0
        %v536 = vadd.f32 %v464, %v535
        %537 = vdwg.mxu0
        %538 = vmatprep.subr.mxu0 %v390
        %539 = vmatpush1.msra.mxu0 %v389
        %540 = vmatprep.subr.mxu0 %v388
        %541 = vmatpush1.msra.mxu0 %v387
        %542 = vmatprep.subr.mxu0 %v386
        %543 = vmatpush1.msra.mxu0 %v385
        %544 = vmatprep.subr.mxu0 %v384
        %545 = vmatpush1.msra.mxu0 %v383
        %546 = vmatprep.subr.mxu0 %v382
        %547 = vmatpush1.msra.mxu0 %v381
        %548 = vmatprep.subr.mxu0 %v380
        %549 = vmatpush1.msra.mxu0 %v379
        %550 = vmatprep.subr.mxu0 %v378
        %551 = vmatpush1.msra.mxu0 %v377
        %552 = vmatprep.subr.mxu0 %v376
        %553 = vmatpush1.msra.mxu0 %v375
        %554 = vmatprep.subr.mxu0 %v374
        %555 = vmatpush1.msra.mxu0 %v373
        %556 = vmatprep.subr.mxu0 %v372
        %557 = vmatpush1.msra.mxu0 %v371
        %558 = vmatprep.subr.mxu0 %v370
        %559 = vmatpush1.msra.mxu0 %v369
        %560 = vmatprep.subr.mxu0 %v368
        %561 = vmatpush1.msra.mxu0 %v367
        %562 = vmatprep.subr.mxu0 %v366
        %563 = vmatpush1.msra.mxu0 %v365
        %564 = vmatprep.subr.mxu0 %v364
        %565 = vmatpush1.msra.mxu0 %v363
        %566 = vmatprep.subr.mxu0 %v362
        %567 = vmatpush1.msra.mxu0 %v361
        %568 = vmatprep.subr.mxu0 %v360
        %569 = vmatpush1.msra.mxu0 %v359
        %570 = vmatprep.subr.mxu0 %v422
        %571 = vmatpush2.msra.mxu0 %v421
        %572 = vmatprep.subr.mxu0 %v420
        %573 = vmatpush2.msra.mxu0 %v419
        %574 = vmatprep.subr.mxu0 %v418
        %575 = vmatpush2.msra.mxu0 %v417
        %576 = vmatprep.subr.mxu0 %v416
        %577 = vmatpush2.msra.mxu0 %v415
        %578 = vmatprep.subr.mxu0 %v414
        %579 = vmatpush2.msra.mxu0 %v413
        %580 = vmatprep.subr.mxu0 %v412
        %581 = vmatpush2.msra.mxu0 %v411
        %582 = vmatprep.subr.mxu0 %v410
        %583 = vmatpush2.msra.mxu0 %v409
        %584 = vmatprep.subr.mxu0 %v408
        %585 = vmatpush2.msra.mxu0 %v407
        %586 = vmatprep.subr.mxu0 %v406
        %587 = vmatpush2.msra.mxu0 %v405
        %588 = vmatprep.subr.mxu0 %v404
        %589 = vmatpush2.msra.mxu0 %v403
        %590 = vmatprep.subr.mxu0 %v402
        %591 = vmatpush2.msra.mxu0 %v401
        %592 = vmatprep.subr.mxu0 %v400
        %593 = vmatpush2.msra.mxu0 %v399
        %594 = vmatprep.subr.mxu0 %v398
        %595 = vmatpush2.msra.mxu0 %v397
        %596 = vmatprep.subr.mxu0 %v396
        %597 = vmatpush2.msra.mxu0 %v395
        %598 = vmatprep.subr.mxu0 %v394
        %599 = vmatpush2.msra.mxu0 %v393
        %600 = vmatprep.subr.mxu0 %v392
        %601 = vmatpush2.msra.mxu0 %v391
        %602 = vmatprep.mubr.f32.mxu0 %v213
        %603 = vmatmul.mubr.f32.gmra.mxu0 %v212
        %v604 = vpop.f32.mrf.mxu0
        %v605 = vadd.f32 %v534, %v604
        %v606 = vpop.f32.mrf.mxu0
        %v607 = vadd.f32 %v536, %v606
        %608 = vdwg.mxu0
        %609 = vmatprep.subr.mxu0 %v454
        %610 = vmatpush1.msra.mxu0 %v453
        %611 = vmatprep.subr.mxu0 %v452
        %612 = vmatpush1.msra.mxu0 %v451
        %613 = vmatprep.subr.mxu0 %v450
        %614 = vmatpush1.msra.mxu0 %v449
        %615 = vmatprep.subr.mxu0 %v448
        %616 = vmatpush1.msra.mxu0 %v447
        %617 = vmatprep.subr.mxu0 %v446
        %618 = vmatpush1.msra.mxu0 %v445
        %619 = vmatprep.subr.mxu0 %v444
        %620 = vmatpush1.msra.mxu0 %v443
        %621 = vmatprep.subr.mxu0 %v442
        %622 = vmatpush1.msra.mxu0 %v441
        %623 = vmatprep.subr.mxu0 %v440
        %624 = vmatpush1.msra.mxu0 %v439
        %625 = vmatprep.subr.mxu0 %v438
        %626 = vmatpush1.msra.mxu0 %v437
        %627 = vmatprep.subr.mxu0 %v436
        %628 = vmatpush1.msra.mxu0 %v435
        %629 = vmatprep.subr.mxu0 %v434
        %630 = vmatpush1.msra.mxu0 %v433
        %631 = vmatprep.subr.mxu0 %v432
        %632 = vmatpush1.msra.mxu0 %v431
        %633 = vmatprep.subr.mxu0 %v430
        %634 = vmatpush1.msra.mxu0 %v429
        %635 = vmatprep.subr.mxu0 %v428
        %636 = vmatpush1.msra.mxu0 %v427
        %637 = vmatprep.subr.mxu0 %v426
        %638 = vmatpush1.msra.mxu0 %v425
        %639 = vmatprep.subr.mxu0 %v424
        %640 = vmatpush1.msra.mxu0 %v423
        %641 = vmatprep.subr.mxu0 0.0
        %642 = vmatpush2.msra.mxu0 0.0
        %643 = vmatprep.subr.mxu0 0.0
        %644 = vmatpush2.msra.mxu0 0.0
        %645 = vmatprep.subr.mxu0 0.0
        %646 = vmatpush2.msra.mxu0 0.0
        %647 = vmatprep.subr.mxu0 0.0
        %648 = vmatpush2.msra.mxu0 0.0
        %649 = vmatprep.subr.mxu0 0.0
        %650 = vmatpush2.msra.mxu0 0.0
        %651 = vmatprep.subr.mxu0 0.0
        %652 = vmatpush2.msra.mxu0 0.0
        %653 = vmatprep.subr.mxu0 0.0
        %654 = vmatpush2.msra.mxu0 0.0
        %655 = vmatprep.subr.mxu0 0.0
        %656 = vmatpush2.msra.mxu0 0.0
        %657 = vmatprep.subr.mxu0 0.0
        %658 = vmatpush2.msra.mxu0 0.0
        %659 = vmatprep.subr.mxu0 0.0
        %660 = vmatpush2.msra.mxu0 0.0
        %661 = vmatprep.subr.mxu0 0.0
        %662 = vmatpush2.msra.mxu0 0.0
        %663 = vmatprep.subr.mxu0 0.0
        %664 = vmatpush2.msra.mxu0 0.0
        %665 = vmatprep.subr.mxu0 0.0
        %666 = vmatpush2.msra.mxu0 0.0
        %667 = vmatprep.subr.mxu0 0.0
        %668 = vmatpush2.msra.mxu0 0.0
        %669 = vmatprep.subr.mxu0 0.0
        %670 = vmatpush2.msra.mxu0 0.0
        %671 = vmatprep.subr.mxu0 0.0
        %672 = vmatpush2.msra.mxu0 0.0
        %673 = vmatprep.mubr.f32.mxu0 0.0
        %674 = vmatmul.mubr.f32.gmra.mxu0 %v214
        %v675 = vpop.f32.mrf.mxu0
        %v676 = vadd.f32 %v605, %v675
        %v677 = vpop.f32.mrf.mxu0
        %v678 = vadd.f32 %v607, %v677
        %679 = vdwg.mxu0
        %v680 = vmax.f32 %v676, 0.0
        %v681 = vmax.f32 %v678, 0.0
        %682 = vst [vmem:[%s202] sm:$0xff] %v680
        %683 = vst [vmem:[%s202 + $0x8] sm:$0xff] %v681
        %s684 = sand.u32 %s101, 1
        %s685 = scalar_lea.sflag [#allocation4], %s684
        %s686 = sand.u32 %s101, 1
        %s687 = smul.addr %s686, 16
        %s688 = scalar_lea.vmem [#allocation5], %s687
        // Predicated region
        $region37: #{align_net_forward.1} parent=31 // pred_check
          %p689 = pneg %p111
        $region38: #{align_net_forward.1} parent=31 // pred_check_branch
          %691 = sbr.rel (%p689) target = $region40
        $region39: #{align_net_forward.1} parent=31 // pred_region
          %s692 = smul.u32 2, %s20
          %s694 = ssub.s32 256, 256
          %695 = vsyncadd %s685, %s694
          %s696 = smul.addr %s692, 128
          %s697 = scalar_lea.hbm %s3, %s696
          %s699 = sshll.u32 %s688, 4
          %s700 = int_to_ptr.vmem [resolvable:$true] %s699
          %702 = dma.vmem_to_hbm [thread:$0]  %s700, 256, %s697, %s685
        $region40: #{align_net_forward.1} parent=31 // pred_fallthru
          _
      $region32: #{align_net_forward.1} parent=5 // pred_fallthru
        _
      %p703 = scmp.le.s32.totalorder 2, %s15
      // Predicated region
      $region41: #{align_net_forward.1} parent=5 // pred_check
        %p704 = pneg %p703
      $region42: #{align_net_forward.1} parent=5 // pred_check_branch
        %706 = sbr.rel (%p704) target = $region44
      $region43: #{align_net_forward.1} parent=5 // pred_region
        %s707 = ssub.s32 %s15, 2
        // Predicated region
        $region45: #{align_net_forward.1} parent=43 // pred_check
          %p708 = pneg %p117
        $region46: #{align_net_forward.1} parent=43 // pred_check_branch
          %710 = sbr.rel (%p708) target = $region48
        $region47: #{align_net_forward.1} parent=43 // pred_region
          %s711 = sand.u32 %s102, 1
          %s712 = scalar_lea.sflag [#allocation4], %s711
          %s713 = sand.u32 %s102, 1
          %s714 = smul.addr %s713, 16
          %s715 = scalar_lea.vmem [#allocation5], %s714
          %716 = dma.done %s712, 256
        $region48: #{align_net_forward.1} parent=43 // pred_fallthru
          _
      $region44: #{align_net_forward.1} parent=5 // pred_fallthru
        _
    $region6: #{align_net_forward.1} parent=1 // loop_footer
      %s19 = sadd.s32 1, %s15
    $region7: #{align_net_forward.1} parent=1 // loop_footer_branch
      %14 = sbr.rel target = $region3
    $region8: #{align_net_forward.1} parent=1 // loop_exit
      _
    %717 = vsyncpa [#allocation3], 1
    %s718 = scalar_lea.sflag [#allocation3], 1
    %719 = vsyncpa %s718, 1
    %720 = vsyncpa [#allocation4], 1
    %s721 = scalar_lea.sflag [#allocation4], 1
    %722 = vsyncpa %s721, 1

</llo_original>
